<compile_context>
chip_gen: v5e
topology: v5e:2x2
jax: 0.10.0
libtpu: 0.0.40
codegen_flags: <defaults>
</compile_context>

<pallas_src>
import functools

import jax
import jax.numpy as jnp
from jax.experimental import pallas as pl
from jax.experimental.pallas import tpu as pltpu

H1, H2, H3 = 256, 512, 128   # hidden widths fixed by the module definition
LANE = 128                   # output last dim padded to a multiple of the TPU lane width


def _round_up(x, m):
    return (x + m - 1) // m * m


def fcn_kernel(x_ref, w1_ref, b1_ref, w2_ref, b2_ref, w3_ref, b3_ref,
               w4_ref, b4_ref, o_ref):
    """Full 4-layer forward for one batch tile.

    bf16 operands into every MXU dot with f32 accumulation; bias-add + ReLU + bf16 downcast are
    fused per layer so only the bf16 intermediate has to stay live (less spill traffic).
    """
    bf = jnp.bfloat16
    x = x_ref[...].astype(bf)   # in-kernel cast: a VPU op that hides under the MXU for free
    h = jnp.maximum(
        jnp.dot(x, w1_ref[...], preferred_element_type=jnp.float32) + b1_ref[...],
        0.0).astype(bf)
    h = jnp.maximum(
        jnp.dot(h, w2_ref[...], preferred_element_type=jnp.float32) + b2_ref[...],
        0.0).astype(bf)
    h = jnp.maximum(
        jnp.dot(h, w3_ref[...], preferred_element_type=jnp.float32) + b3_ref[...],
        0.0).astype(bf)
    out = jnp.dot(h, w4_ref[...], preferred_element_type=jnp.float32) + b4_ref[...]
    o_ref[...] = out.astype(o_ref.dtype)


def _choose_tiling(batch, block_b):
    """Pick (tile_rows, grid_steps).

    >= 2 grid steps whenever the batch allows it (so v7x's two TensorCores both get work via the
    "parallel" axis), and bb = round_up(cdiv(B, nsteps), 8) so the padded/partial tail is at most
    a few sublane rows instead of rounding B up to a full block_b multiple.
    """
    nsteps = pl.cdiv(batch, block_b)
    if batch > 8:
        nsteps = max(nsteps, 2)
    bb = _round_up(pl.cdiv(batch, nsteps), 8)
    return bb, nsteps


def prepare_params(params):
    """One-time parameter prep (outside the per-call jit): bf16 weights, f32 biases,
    last layer zero-padded to a lane multiple (unmasked vst stores)."""
    w1, b1, w2, b2, w3, b3, w4, b4 = params
    out_dim = w4.shape[1]
    dout_pad = _round_up(out_dim, LANE)
    if dout_pad != out_dim:
        w4 = jnp.pad(w4, ((0, 0), (0, dout_pad - out_dim)))
        b4 = jnp.pad(b4, ((0, 0), (0, dout_pad - out_dim)))
    ws = [w.astype(jnp.bfloat16) for w in (w1, w2, w3, w4)]
    bs = [b.astype(jnp.float32).reshape(1, -1) for b in (b1, b2, b3, b4)]
    prepared = (ws[0], bs[0], ws[1], bs[1], ws[2], bs[2], ws[3], bs[3])
    return prepared, out_dim


@functools.partial(jax.jit, static_argnames=("out_dim", "block_b"))
def fcn_forward(x, prepared_params, *, out_dim, block_b=2048):
    """x: (B, input_dim) in any float dtype; prepared_params from prepare_params()."""
    w1, b1, w2, b2, w3, b3, w4, b4 = prepared_params
    B, Din = x.shape
    Dout_pad = w4.shape[1]

    bb, nsteps = _choose_tiling(B, block_b)

    # Weights/biases stay resident in VMEM via a constant index_map (<1 MiB total in bf16).
    # NOTE(synk): they could be single-buffered with pipeline_mode=pl.Buffered(1); left at the
    # default double-buffering for maximum compiler-version portability (cost is <1 MiB VMEM).
    full = lambda arr: pl.BlockSpec(arr.shape, lambda i: (0, 0))

    out = pl.pallas_call(
        fcn_kernel,
        out_shape=jax.ShapeDtypeStruct((B, Dout_pad), jnp.float32),
        grid_spec=pltpu.PrefetchScalarGridSpec(
            num_scalar_prefetch=0,
            grid=(nsteps,),
            in_specs=[
                pl.BlockSpec((bb, Din), lambda i: (i, 0)),   # batch tile of x (native dtype)
                full(w1), full(b1),
                full(w2), full(b2),
                full(w3), full(b3),
                full(w4), full(b4),
            ],
            out_specs=pl.BlockSpec((bb, Dout_pad), lambda i: (i, 0)),
        ),
        compiler_params=pltpu.CompilerParams(
            dimension_semantics=("parallel",),          # megacore / dual-TC sharding of batch tiles
            vmem_limit_bytes=48 * 1024 * 1024,          # headroom for bb up to 2048 (needed on v5e)
        ),
    )(x, w1, b1, w2, b2, w3, b3, w4, b4)

    # Slice off the lane padding of the last layer. (Any partial-tail garbage rows were masked out
    # by the (B, Dout_pad) out_shape and never stored.)
    return out[:, :out_dim]


def init_params(key, input_dim, output_dim):
    """Deterministic, PyTorch-Linear-style init (uniform(-1/sqrt(fan_in), 1/sqrt(fan_in)))."""
    dims = [(input_dim, H1), (H1, H2), (H2, H3), (H3, output_dim)]
    params = []
    for (fan_in, fan_out) in dims:
        key, kw, kb = jax.random.split(key, 3)
        bound = 1.0 / jnp.sqrt(jnp.float32(fan_in))
        # stored already transposed to (in, out) for the kernel's x @ W convention
        w = jax.random.uniform(kw, (fan_in, fan_out), jnp.float32, -bound, bound)
        b = jax.random.uniform(kb, (1, fan_out), jnp.float32, -bound, bound)
        params.extend([w, b])
    return tuple(params)


def reference_forward_f32(x, params):
    """Pure-f32 reference matching the PyTorch module's math."""
    w1, b1, w2, b2, w3, b3, w4, b4 = params
    h = jnp.maximum(x @ w1 + b1, 0.0)
    h = jnp.maximum(h @ w2 + b2, 0.0)
    h = jnp.maximum(h @ w3 + b3, 0.0)
    return h @ w4 + b4


def reference_forward_bf16(x, params):
    """Emulates the kernel's bf16-operand / f32-accumulate arithmetic."""
    w1, b1, w2, b2, w3, b3, w4, b4 = params
    bf = jnp.bfloat16
    dot = lambda a, b: jnp.dot(a.astype(bf), b.astype(bf),
                               preferred_element_type=jnp.float32)
    h = jnp.maximum(dot(x, w1) + b1, 0.0)
    h = jnp.maximum(dot(h, w2) + b2, 0.0)
    h = jnp.maximum(dot(h, w3) + b3, 0.0)
    return dot(h, w4) + b4


if __name__ == "__main__":
    key = jax.random.PRNGKey(0)
    batch, input_dim, output_dim = 16, 32, 16

    key, kx = jax.random.split(key)
    x = jax.random.normal(kx, (batch, input_dim), jnp.float32)
    params = init_params(key, input_dim, output_dim)

    prepared, out_dim = prepare_params(params)
    out = fcn_forward(x, prepared, out_dim=out_dim)
    out = jax.block_until_ready(out)
    assert out.shape == (batch, output_dim)
    assert out.dtype == jnp.float32

    # Tight check against a reference using the same bf16-operand / f32-accumulate arithmetic.
    ref_bf16 = reference_forward_bf16(x, params)
    assert jnp.allclose(out, ref_bf16, atol=2e-3, rtol=2e-3), \
        "Pallas output mismatch vs bf16-emulated reference"

    # Loose check against the full-f32 PyTorch-equivalent forward (bf16 quantization tolerance).
    ref_f32 = reference_forward_f32(x, params)
    assert jnp.allclose(out, ref_f32, atol=5e-2, rtol=5e-2), \
        "Pallas output mismatch vs f32 reference"

    print("KERNEL_OK")
</pallas_src>

<mosaic_0001>
module attributes {stable_mosaic.version = 11 : i64} {
  func.func @fcn_kernel(%arg0: i32, %arg1: memref<8x32xf32, #tpu.memory_space<vmem>>, %arg2: memref<32x256xbf16, #tpu.memory_space<vmem>>, %arg3: memref<1x256xf32, #tpu.memory_space<vmem>>, %arg4: memref<256x512xbf16, #tpu.memory_space<vmem>>, %arg5: memref<1x512xf32, #tpu.memory_space<vmem>>, %arg6: memref<512x128xbf16, #tpu.memory_space<vmem>>, %arg7: memref<1x128xf32, #tpu.memory_space<vmem>>, %arg8: memref<128x128xbf16, #tpu.memory_space<vmem>>, %arg9: memref<1x128xf32, #tpu.memory_space<vmem>>, %arg10: memref<8x128xf32, #tpu.memory_space<vmem>>) attributes {dimension_semantics = [#tpu.dimension_semantics<parallel>], iteration_bounds = array<i64: 2>, scalar_prefetch = 0 : i64, scratch_operands = 0 : i64, tpu.core_type = #tpu.core_type<tc>, window_params = [{transform_indices = @transform_0, window_bounds = array<i64: 8, 32>}, {pipeline_mode = #tpu.pipeline_mode<synchronous>, transform_indices = @transform_1, window_bounds = array<i64: 32, 256>}, {pipeline_mode = #tpu.pipeline_mode<synchronous>, transform_indices = @transform_2, window_bounds = array<i64: 1, 256>}, {pipeline_mode = #tpu.pipeline_mode<synchronous>, transform_indices = @transform_3, window_bounds = array<i64: 256, 512>}, {pipeline_mode = #tpu.pipeline_mode<synchronous>, transform_indices = @transform_4, window_bounds = array<i64: 1, 512>}, {pipeline_mode = #tpu.pipeline_mode<synchronous>, transform_indices = @transform_5, window_bounds = array<i64: 512, 128>}, {pipeline_mode = #tpu.pipeline_mode<synchronous>, transform_indices = @transform_6, window_bounds = array<i64: 1, 128>}, {pipeline_mode = #tpu.pipeline_mode<synchronous>, transform_indices = @transform_7, window_bounds = array<i64: 128, 128>}, {pipeline_mode = #tpu.pipeline_mode<synchronous>, transform_indices = @transform_8, window_bounds = array<i64: 1, 128>}, {transform_indices = @transform_9, window_bounds = array<i64: 8, 128>}]} {
    %c0 = arith.constant 0 : index
    %c0_0 = arith.constant 0 : index
    %0 = vector.load %arg1[%c0, %c0_0] : memref<8x32xf32, #tpu.memory_space<vmem>>, vector<8x32xf32>
    %1 = arith.truncf %0 : vector<8x32xf32> to vector<8x32xbf16>
    %c0_1 = arith.constant 0 : index
    %c0_2 = arith.constant 0 : index
    %2 = vector.load %arg2[%c0_1, %c0_2] : memref<32x256xbf16, #tpu.memory_space<vmem>>, vector<32x256xbf16>
    %cst = arith.constant dense<0.000000e+00> : vector<8x256xf32>
    %3 = tpu.matmul %1, %2, %cst {dimension_numbers = #tpu.dot_dimension_numbers<[1], [0], [0], [1], [0, 0, 1, 1], [], []>} : vector<8x32xbf16>, vector<32x256xbf16>, vector<8x256xf32> -> vector<8x256xf32>
    %c0_3 = arith.constant 0 : index
    %c0_4 = arith.constant 0 : index
    %4 = vector.load %arg3[%c0_3, %c0_4] : memref<1x256xf32, #tpu.memory_space<vmem>>, vector<1x256xf32>
    %5 = vector.broadcast %4 : vector<1x256xf32> to vector<8x256xf32>
    %6 = arith.addf %3, %5 : vector<8x256xf32>
    %cst_5 = arith.constant 0.000000e+00 : f32
    %7 = vector.broadcast %cst_5 : f32 to vector<8x256xf32>
    %8 = arith.maximumf %6, %7 : vector<8x256xf32>
    %9 = arith.truncf %8 : vector<8x256xf32> to vector<8x256xbf16>
    %c0_6 = arith.constant 0 : index
    %c0_7 = arith.constant 0 : index
    %10 = vector.load %arg4[%c0_6, %c0_7] : memref<256x512xbf16, #tpu.memory_space<vmem>>, vector<256x512xbf16>
    %cst_8 = arith.constant dense<0.000000e+00> : vector<8x512xf32>
    %11 = tpu.matmul %9, %10, %cst_8 {dimension_numbers = #tpu.dot_dimension_numbers<[1], [0], [0], [1], [0, 0, 1, 1], [], []>} : vector<8x256xbf16>, vector<256x512xbf16>, vector<8x512xf32> -> vector<8x512xf32>
    %c0_9 = arith.constant 0 : index
    %c0_10 = arith.constant 0 : index
    %12 = vector.load %arg5[%c0_9, %c0_10] : memref<1x512xf32, #tpu.memory_space<vmem>>, vector<1x512xf32>
    %13 = vector.broadcast %12 : vector<1x512xf32> to vector<8x512xf32>
    %14 = arith.addf %11, %13 : vector<8x512xf32>
    %cst_11 = arith.constant 0.000000e+00 : f32
    %15 = vector.broadcast %cst_11 : f32 to vector<8x512xf32>
    %16 = arith.maximumf %14, %15 : vector<8x512xf32>
    %17 = arith.truncf %16 : vector<8x512xf32> to vector<8x512xbf16>
    %c0_12 = arith.constant 0 : index
    %c0_13 = arith.constant 0 : index
    %18 = vector.load %arg6[%c0_12, %c0_13] : memref<512x128xbf16, #tpu.memory_space<vmem>>, vector<512x128xbf16>
    %cst_14 = arith.constant dense<0.000000e+00> : vector<8x128xf32>
    %19 = tpu.matmul %17, %18, %cst_14 {dimension_numbers = #tpu.dot_dimension_numbers<[1], [0], [0], [1], [0, 0, 1, 1], [], []>} : vector<8x512xbf16>, vector<512x128xbf16>, vector<8x128xf32> -> vector<8x128xf32>
    %c0_15 = arith.constant 0 : index
    %c0_16 = arith.constant 0 : index
    %20 = vector.load %arg7[%c0_15, %c0_16] : memref<1x128xf32, #tpu.memory_space<vmem>>, vector<1x128xf32>
    %21 = vector.broadcast %20 : vector<1x128xf32> to vector<8x128xf32>
    %22 = arith.addf %19, %21 : vector<8x128xf32>
    %cst_17 = arith.constant 0.000000e+00 : f32
    %23 = vector.broadcast %cst_17 : f32 to vector<8x128xf32>
    %24 = arith.maximumf %22, %23 : vector<8x128xf32>
    %25 = arith.truncf %24 : vector<8x128xf32> to vector<8x128xbf16>
    %c0_18 = arith.constant 0 : index
    %c0_19 = arith.constant 0 : index
    %26 = vector.load %arg8[%c0_18, %c0_19] : memref<128x128xbf16, #tpu.memory_space<vmem>>, vector<128x128xbf16>
    %cst_20 = arith.constant dense<0.000000e+00> : vector<8x128xf32>
    %27 = tpu.matmul %25, %26, %cst_20 {dimension_numbers = #tpu.dot_dimension_numbers<[1], [0], [0], [1], [0, 0, 1, 1], [], []>} : vector<8x128xbf16>, vector<128x128xbf16>, vector<8x128xf32> -> vector<8x128xf32>
    %c0_21 = arith.constant 0 : index
    %c0_22 = arith.constant 0 : index
    %28 = vector.load %arg9[%c0_21, %c0_22] : memref<1x128xf32, #tpu.memory_space<vmem>>, vector<1x128xf32>
    %29 = vector.broadcast %28 : vector<1x128xf32> to vector<8x128xf32>
    %30 = arith.addf %27, %29 : vector<8x128xf32>
    %c0_23 = arith.constant 0 : index
    %c0_24 = arith.constant 0 : index
    %31 = vector.load %arg10[%c0_23, %c0_24] : memref<8x128xf32, #tpu.memory_space<vmem>>, vector<8x128xf32>
    tpu.vector_store %arg10[%c0_23, %c0_24], %30 {strides = array<i32>} : memref<8x128xf32, #tpu.memory_space<vmem>>, vector<8x128xf32>,
    return
  }
  func.func @transform_0(%arg0: i32) -> (i32, i32) {
    %c0_i32 = arith.constant 0 : i32
    %c0_i32_0 = arith.constant 0 : i32
    return %arg0, %c0_i32 : i32, i32
  }
  func.func @transform_1(%arg0: i32) -> (i32, i32) {
    %c0_i32 = arith.constant 0 : i32
    %c0_i32_0 = arith.constant 0 : i32
    %c0_i32_1 = arith.constant 0 : i32
    return %c0_i32, %c0_i32_0 : i32, i32
  }
  func.func @transform_2(%arg0: i32) -> (i32, i32) {
    %c0_i32 = arith.constant 0 : i32
    %c0_i32_0 = arith.constant 0 : i32
    %c0_i32_1 = arith.constant 0 : i32
    return %c0_i32, %c0_i32_0 : i32, i32
  }
  func.func @transform_3(%arg0: i32) -> (i32, i32) {
    %c0_i32 = arith.constant 0 : i32
    %c0_i32_0 = arith.constant 0 : i32
    %c0_i32_1 = arith.constant 0 : i32
    return %c0_i32, %c0_i32_0 : i32, i32
  }
  func.func @transform_4(%arg0: i32) -> (i32, i32) {
    %c0_i32 = arith.constant 0 : i32
    %c0_i32_0 = arith.constant 0 : i32
    %c0_i32_1 = arith.constant 0 : i32
    return %c0_i32, %c0_i32_0 : i32, i32
  }
  func.func @transform_5(%arg0: i32) -> (i32, i32) {
    %c0_i32 = arith.constant 0 : i32
    %c0_i32_0 = arith.constant 0 : i32
    %c0_i32_1 = arith.constant 0 : i32
    return %c0_i32, %c0_i32_0 : i32, i32
  }
  func.func @transform_6(%arg0: i32) -> (i32, i32) {
    %c0_i32 = arith.constant 0 : i32
    %c0_i32_0 = arith.constant 0 : i32
    %c0_i32_1 = arith.constant 0 : i32
    return %c0_i32, %c0_i32_0 : i32, i32
  }
  func.func @transform_7(%arg0: i32) -> (i32, i32) {
    %c0_i32 = arith.constant 0 : i32
    %c0_i32_0 = arith.constant 0 : i32
    %c0_i32_1 = arith.constant 0 : i32
    return %c0_i32, %c0_i32_0 : i32, i32
  }
  func.func @transform_8(%arg0: i32) -> (i32, i32) {
    %c0_i32 = arith.constant 0 : i32
    %c0_i32_0 = arith.constant 0 : i32
    %c0_i32_1 = arith.constant 0 : i32
    return %c0_i32, %c0_i32_0 : i32, i32
  }
  func.func @transform_9(%arg0: i32) -> (i32, i32) {
    %c0_i32 = arith.constant 0 : i32
    %c0_i32_0 = arith.constant 0 : i32
    return %arg0, %c0_i32 : i32, i32
  }
}

</mosaic_0001>

<llo_original>
// kernel: fcn_forward.1
$region0: #{fcn_forward.1}
  #allocation0 [shape = 'u32[]', space=smem, size = 0x4, offset = 0x4, fixed_abs, tag = 'smem constant byte address 0x4 - core index']
  #allocation1 [shape = 'u32[72,128]{1,0:T(1,128)}', space=vmem, size = 0x9000, scoped, tag = 'internal scratch']
  %s0 = inlined_call_operand.hbm [shape: f32[16,32], index: 0, kind: input, shape index: {}]
  %s1 = inlined_call_operand.hbm [shape: bf16[32,256], index: 1, kind: input, shape index: {}]
  %s2 = inlined_call_operand.hbm [shape: f32[1,256], index: 2, kind: input, shape index: {}]
  %s3 = inlined_call_operand.hbm [shape: bf16[256,512], index: 3, kind: input, shape index: {}]
  %s4 = inlined_call_operand.hbm [shape: f32[1,512], index: 4, kind: input, shape index: {}]
  %s5 = inlined_call_operand.hbm [shape: bf16[512,128], index: 5, kind: input, shape index: {}]
  %s6 = inlined_call_operand.vmem [shape: f32[1,128], index: 6, kind: input, shape index: {}]
  %s7 = inlined_call_operand.hbm [shape: bf16[128,128], index: 7, kind: input, shape index: {}]
  %s8 = inlined_call_operand.vmem [shape: f32[1,128], index: 8, kind: input, shape index: {}]
  %s9 = inlined_call_operand.hbm [shape: f32[16,128], index: 9, kind: output, shape index: {}]
  %s10 = sld [smem:[#allocation0]]
  $region97: #{fcn_forward.1} parent=0
    _
  %s12 = ssub.s32 1, %s10
  %s13 = scalar_select 0, %s12, %s10
  $region1: #{fcn_forward.1} parent=0
    #allocation2 [shape = 'u8[8192]{0}', space=vmem, size = 0x2000, scoped, tag = 'input window, operand 0']
    #allocation3 [shape = 's32[2]{0}', space=sflag, size = 0x8, scoped, tag = 'scoped memory for fcn_forward.1']
    #allocation4 [shape = 's32[2]{0}', space=sflag, size = 0x8, scoped, tag = 'scoped memory for fcn_forward.1']
    #allocation5 [shape = 'u8[16384]{0}', space=vmem, size = 0x4000, scoped, tag = 'input window, operand 1, single buffered']
    #allocation6 [shape = 's32[1]{0}', space=sflag, size = 0x4, scoped, tag = 'scoped memory for fcn_forward.1']
    #allocation7 [shape = 'u8[1024]{0}', space=vmem, size = 0x400, scoped, tag = 'input window, operand 2, single buffered']
    #allocation8 [shape = 'u8[262144]{0}', space=vmem, size = 0x40000, scoped, tag = 'input window, operand 3, single buffered']
    #allocation9 [shape = 's32[1]{0}', space=sflag, size = 0x4, scoped, tag = 'scoped memory for fcn_forward.1']
    #allocation10 [shape = 'u8[2048]{0}', space=vmem, size = 0x800, scoped, tag = 'input window, operand 4, single buffered']
    #allocation11 [shape = 'u8[131072]{0}', space=vmem, size = 0x20000, scoped, tag = 'input window, operand 5, single buffered']
    #allocation12 [shape = 's32[1]{0}', space=sflag, size = 0x4, scoped, tag = 'scoped memory for fcn_forward.1']
    #allocation13 [shape = 'u8[32768]{0}', space=vmem, size = 0x8000, scoped, tag = 'input window, operand 7, single buffered']
    #allocation14 [shape = 'u8[8192]{0}', space=vmem, size = 0x2000, scoped, tag = 'output window, operand 0']
    %14 = vsyncpa [#allocation3], 0
    %s15 = scalar_lea.sflag [#allocation3], 1
    %16 = vsyncpa %s15, 0
    %17 = vsyncpa [#allocation6], 0
    %18 = vsyncpa [#allocation9], 0
    %19 = vsyncpa [#allocation12], 0
    %20 = vsyncpa [#allocation4], 0
    %s21 = scalar_lea.sflag [#allocation4], 1
    %22 = vsyncpa %s21, 0
    loop: start=0, step=1, limit=4
    $region2: #{fcn_forward.1} parent=1 // loop_pre_header
      _
    $region3: #{fcn_forward.1} parent=1 // loop_header
      %s24 = sphi 0, %s28
      %p25 = scmp.ge.s32.totalorder %s24, 4
      %s34 = sphi 0, %s36
      %s37 = sphi 0, %s34
      %s38 = sphi 0, %s37
      %s54 = sphi 0, %s38
      %s58 = sphi 0, %s58
      %s60 = sphi 0, %s58
      %s61 = sphi 0, %s60
      %s75 = sphi 0, %s61
      %s79 = sphi 0, %s79
      %s81 = sphi 0, %s79
      %s82 = sphi 0, %s81
      %s96 = sphi 0, %s82
      %s100 = sphi 0, %s100
      %s102 = sphi 0, %s100
      %s103 = sphi 0, %s102
      %s117 = sphi 0, %s103
      %s121 = sphi 0, %s121
      %s123 = sphi 0, %s121
      %s124 = sphi 0, %s123
      %s138 = sphi 0, %s124
      %s142 = sphi 0, %s142
      %s144 = sphi 0, %s142
      %s145 = sphi 0, %s144
      %s159 = sphi 0, %s145
      %s163 = sphi 0, %s163
      %s165 = sphi 0, %s163
      %s166 = sphi 0, %s165
      %s180 = sphi 0, %s166
      %s184 = sphi 0, %s184
      %s186 = sphi 0, %s184
      %s187 = sphi 0, %s186
      %s201 = sphi 0, %s187
      %s205 = sphi 0, %s205
      %s207 = sphi 0, %s205
      %s208 = sphi 0, %s207
      %s222 = sphi 0, %s208
      %s228 = sphi 0, %s230
      %s231 = sphi 0, %s228
      %s232 = sphi 0, %s231
      %s248 = sphi 0, %s232
    $region4: #{fcn_forward.1} parent=1 // loop_header_branch
      %27 = sbr.rel (%p25) target = $region8
    $region5: #{fcn_forward.1} parent=1 // loop_body
      %s29 = ssub.s32 %s24, 1
      %s30 = ssub.s32 %s24, 2
      %s31 = sadd.s32 %s24, 1
      %s32 = ssub.s32 %s24, %s31
      %p33 = scmp.eq.s32.totalorder %s32, 0
      %s35 = sadd.s32 %s34, 1
      %s36 = scalar_select %p33, %s34, %s35
      %p39 = pneg %p33
      %p40 = scmp.eq.s32.totalorder %s24, 1
      %p41 = por %p39, %p40
      %p42 = scmp.ne.s32.totalorder %s34, %s37
      %p43 = scmp.eq.s32.totalorder %s24, 0
      %p44 = por %p42, %p43
      %p45 = scmp.ne.s32.totalorder %s34, %s37
      %p46 = scmp.eq.s32.totalorder %s29, 1
      %p47 = por %p45, %p46
      %p48 = scmp.ne.s32.totalorder %s37, %s38
      %p49 = scmp.eq.s32.totalorder %s29, 0
      %p50 = por %p48, %p49
      %p51 = scmp.ne.s32.totalorder %s37, %s38
      %p52 = scmp.eq.s32.totalorder %s30, 1
      %p53 = por %p51, %p52
      %p55 = scmp.ne.s32.totalorder %s38, %s54
      %p56 = scmp.eq.s32.totalorder %s30, 0
      %p57 = por %p55, %p56
      %s59 = sadd.s32 %s58, 1
      %p62 = scmp.eq.s32.totalorder %s24, 1
      %p63 = scmp.ne.s32.totalorder %s58, %s60
      %p64 = scmp.eq.s32.totalorder %s24, 0
      %p65 = por %p63, %p64
      %p66 = scmp.ne.s32.totalorder %s58, %s60
      %p67 = scmp.eq.s32.totalorder %s29, 1
      %p68 = por %p66, %p67
      %p69 = scmp.ne.s32.totalorder %s60, %s61
      %p70 = scmp.eq.s32.totalorder %s29, 0
      %p71 = por %p69, %p70
      %p72 = scmp.ne.s32.totalorder %s60, %s61
      %p73 = scmp.eq.s32.totalorder %s30, 1
      %p74 = por %p72, %p73
      %p76 = scmp.ne.s32.totalorder %s61, %s75
      %p77 = scmp.eq.s32.totalorder %s30, 0
      %p78 = por %p76, %p77
      %s80 = sadd.s32 %s79, 1
      %p83 = scmp.eq.s32.totalorder %s24, 1
      %p84 = scmp.ne.s32.totalorder %s79, %s81
      %p85 = scmp.eq.s32.totalorder %s24, 0
      %p86 = por %p84, %p85
      %p87 = scmp.ne.s32.totalorder %s79, %s81
      %p88 = scmp.eq.s32.totalorder %s29, 1
      %p89 = por %p87, %p88
      %p90 = scmp.ne.s32.totalorder %s81, %s82
      %p91 = scmp.eq.s32.totalorder %s29, 0
      %p92 = por %p90, %p91
      %p93 = scmp.ne.s32.totalorder %s81, %s82
      %p94 = scmp.eq.s32.totalorder %s30, 1
      %p95 = por %p93, %p94
      %p97 = scmp.ne.s32.totalorder %s82, %s96
      %p98 = scmp.eq.s32.totalorder %s30, 0
      %p99 = por %p97, %p98
      %s101 = sadd.s32 %s100, 1
      %p104 = scmp.eq.s32.totalorder %s24, 1
      %p105 = scmp.ne.s32.totalorder %s100, %s102
      %p106 = scmp.eq.s32.totalorder %s24, 0
      %p107 = por %p105, %p106
      %p108 = scmp.ne.s32.totalorder %s100, %s102
      %p109 = scmp.eq.s32.totalorder %s29, 1
      %p110 = por %p108, %p109
      %p111 = scmp.ne.s32.totalorder %s102, %s103
      %p112 = scmp.eq.s32.totalorder %s29, 0
      %p113 = por %p111, %p112
      %p114 = scmp.ne.s32.totalorder %s102, %s103
      %p115 = scmp.eq.s32.totalorder %s30, 1
      %p116 = por %p114, %p115
      %p118 = scmp.ne.s32.totalorder %s103, %s117
      %p119 = scmp.eq.s32.totalorder %s30, 0
      %p120 = por %p118, %p119
      %s122 = sadd.s32 %s121, 1
      %p125 = scmp.eq.s32.totalorder %s24, 1
      %p126 = scmp.ne.s32.totalorder %s121, %s123
      %p127 = scmp.eq.s32.totalorder %s24, 0
      %p128 = por %p126, %p127
      %p129 = scmp.ne.s32.totalorder %s121, %s123
      %p130 = scmp.eq.s32.totalorder %s29, 1
      %p131 = por %p129, %p130
      %p132 = scmp.ne.s32.totalorder %s123, %s124
      %p133 = scmp.eq.s32.totalorder %s29, 0
      %p134 = por %p132, %p133
      %p135 = scmp.ne.s32.totalorder %s123, %s124
      %p136 = scmp.eq.s32.totalorder %s30, 1
      %p137 = por %p135, %p136
      %p139 = scmp.ne.s32.totalorder %s124, %s138
      %p140 = scmp.eq.s32.totalorder %s30, 0
      %p141 = por %p139, %p140
      %s143 = sadd.s32 %s142, 1
      %p146 = scmp.eq.s32.totalorder %s24, 1
      %p147 = scmp.ne.s32.totalorder %s142, %s144
      %p148 = scmp.eq.s32.totalorder %s24, 0
      %p149 = por %p147, %p148
      %p150 = scmp.ne.s32.totalorder %s142, %s144
      %p151 = scmp.eq.s32.totalorder %s29, 1
      %p152 = por %p150, %p151
      %p153 = scmp.ne.s32.totalorder %s144, %s145
      %p154 = scmp.eq.s32.totalorder %s29, 0
      %p155 = por %p153, %p154
      %p156 = scmp.ne.s32.totalorder %s144, %s145
      %p157 = scmp.eq.s32.totalorder %s30, 1
      %p158 = por %p156, %p157
      %p160 = scmp.ne.s32.totalorder %s145, %s159
      %p161 = scmp.eq.s32.totalorder %s30, 0
      %p162 = por %p160, %p161
      %s164 = sadd.s32 %s163, 1
      %p167 = scmp.eq.s32.totalorder %s24, 1
      %p168 = scmp.ne.s32.totalorder %s163, %s165
      %p169 = scmp.eq.s32.totalorder %s24, 0
      %p170 = por %p168, %p169
      %p171 = scmp.ne.s32.totalorder %s163, %s165
      %p172 = scmp.eq.s32.totalorder %s29, 1
      %p173 = por %p171, %p172
      %p174 = scmp.ne.s32.totalorder %s165, %s166
      %p175 = scmp.eq.s32.totalorder %s29, 0
      %p176 = por %p174, %p175
      %p177 = scmp.ne.s32.totalorder %s165, %s166
      %p178 = scmp.eq.s32.totalorder %s30, 1
      %p179 = por %p177, %p178
      %p181 = scmp.ne.s32.totalorder %s166, %s180
      %p182 = scmp.eq.s32.totalorder %s30, 0
      %p183 = por %p181, %p182
      %s185 = sadd.s32 %s184, 1
      %p188 = scmp.eq.s32.totalorder %s24, 1
      %p189 = scmp.ne.s32.totalorder %s184, %s186
      %p190 = scmp.eq.s32.totalorder %s24, 0
      %p191 = por %p189, %p190
      %p192 = scmp.ne.s32.totalorder %s184, %s186
      %p193 = scmp.eq.s32.totalorder %s29, 1
      %p194 = por %p192, %p193
      %p195 = scmp.ne.s32.totalorder %s186, %s187
      %p196 = scmp.eq.s32.totalorder %s29, 0
      %p197 = por %p195, %p196
      %p198 = scmp.ne.s32.totalorder %s186, %s187
      %p199 = scmp.eq.s32.totalorder %s30, 1
      %p200 = por %p198, %p199
      %p202 = scmp.ne.s32.totalorder %s187, %s201
      %p203 = scmp.eq.s32.totalorder %s30, 0
      %p204 = por %p202, %p203
      %s206 = sadd.s32 %s205, 1
      %p209 = scmp.eq.s32.totalorder %s24, 1
      %p210 = scmp.ne.s32.totalorder %s205, %s207
      %p211 = scmp.eq.s32.totalorder %s24, 0
      %p212 = por %p210, %p211
      %p213 = scmp.ne.s32.totalorder %s205, %s207
      %p214 = scmp.eq.s32.totalorder %s29, 1
      %p215 = por %p213, %p214
      %p216 = scmp.ne.s32.totalorder %s207, %s208
      %p217 = scmp.eq.s32.totalorder %s29, 0
      %p218 = por %p216, %p217
      %p219 = scmp.ne.s32.totalorder %s207, %s208
      %p220 = scmp.eq.s32.totalorder %s30, 1
      %p221 = por %p219, %p220
      %p223 = scmp.ne.s32.totalorder %s208, %s222
      %p224 = scmp.eq.s32.totalorder %s30, 0
      %p225 = por %p223, %p224
      %s226 = ssub.s32 %s24, %s31
      %p227 = scmp.eq.s32.totalorder %s226, 0
      %s229 = sadd.s32 %s228, 1
      %s230 = scalar_select %p227, %s228, %s229
      %p233 = pneg %p227
      %p234 = scmp.eq.s32.totalorder %s24, 1
      %p235 = por %p233, %p234
      %p236 = scmp.ne.s32.totalorder %s228, %s231
      %p237 = scmp.eq.s32.totalorder %s24, 0
      %p238 = por %p236, %p237
      %p239 = scmp.ne.s32.totalorder %s228, %s231
      %p240 = scmp.eq.s32.totalorder %s29, 1
      %p241 = por %p239, %p240
      %p242 = scmp.ne.s32.totalorder %s231, %s232
      %p243 = scmp.eq.s32.totalorder %s29, 0
      %p244 = por %p242, %p243
      %p245 = scmp.ne.s32.totalorder %s231, %s232
      %p246 = scmp.eq.s32.totalorder %s30, 1
      %p247 = por %p245, %p246
      %p249 = scmp.ne.s32.totalorder %s232, %s248
      %p250 = scmp.eq.s32.totalorder %s30, 0
      %p251 = por %p249, %p250
      %p252 = scmp.le.s32.totalorder 1, %s24
      %p253 = scmp.lt.s32.totalorder %s24, 3
      %p254 = pnand %p252, %p253
      %p255 = pneg %p254
      // Predicated region
      $region9: #{fcn_forward.1} parent=5 // pred_check
        _
      $region10: #{fcn_forward.1} parent=5 // pred_check_branch
        %257 = sbr.rel (%p254) target = $region12
      $region11: #{fcn_forward.1} parent=5 // pred_region
        %s258 = ssub.s32 %s24, 1
        // Predicated region
        $region13: #{fcn_forward.1} parent=11 // pred_check
          %p259 = pneg %p71
        $region14: #{fcn_forward.1} parent=11 // pred_check_branch
          %261 = sbr.rel (%p259) target = $region16
        $region15: #{fcn_forward.1} parent=11 // pred_region
          %263 = vsyncadd [#allocation6], 0
          %s264 = sshll.u32 %s1, 4
          %s265 = int_to_ptr.hbm [resolvable:$true] %s264
          %s266 = sshll.u32 [#allocation5], 4
          %s267 = int_to_ptr.vmem [resolvable:$true] %s266
          %272 = dma.hbm_to_vmem [thread:$0]  %s265, 512, %s267, [#allocation6], 128, 128, 8
        $region16: #{fcn_forward.1} parent=11 // pred_fallthru
          _
        // Predicated region
        $region17: #{fcn_forward.1} parent=11 // pred_check
          %p273 = pneg %p92
        $region18: #{fcn_forward.1} parent=11 // pred_check_branch
          %275 = sbr.rel (%p273) target = $region20
        $region19: #{fcn_forward.1} parent=11 // pred_region
          %277 = vsyncadd [#allocation6], 0
          %s279 = sshll.u32 %s2, 4
          %s280 = int_to_ptr.hbm [resolvable:$true] %s279
          %s281 = sshll.u32 [#allocation7], 4
          %s282 = int_to_ptr.vmem [resolvable:$true] %s281
          %284 = dma.hbm_to_vmem [thread:$0]  %s280, 32, %s282, [#allocation6]
        $region20: #{fcn_forward.1} parent=11 // pred_fallthru
          _
        // Predicated region
        $region21: #{fcn_forward.1} parent=11 // pred_check
          %p285 = pneg %p113
        $region22: #{fcn_forward.1} parent=11 // pred_check_branch
          %287 = sbr.rel (%p285) target = $region24
        $region23: #{fcn_forward.1} parent=11 // pred_region
          %289 = vsyncadd [#allocation9], 0
          %s290 = sshll.u32 %s3, 4
          %s291 = int_to_ptr.hbm [resolvable:$true] %s290
          %s292 = sshll.u32 [#allocation8], 4
          %s293 = int_to_ptr.vmem [resolvable:$true] %s292
          %298 = dma.hbm_to_vmem [thread:$0]  %s291, 8192, %s293, [#allocation9], 256, 256, 16
        $region24: #{fcn_forward.1} parent=11 // pred_fallthru
          _
        // Predicated region
        $region25: #{fcn_forward.1} parent=11 // pred_check
          %p299 = pneg %p134
        $region26: #{fcn_forward.1} parent=11 // pred_check_branch
          %301 = sbr.rel (%p299) target = $region28
        $region27: #{fcn_forward.1} parent=11 // pred_region
          %303 = vsyncadd [#allocation9], 0
          %s305 = sshll.u32 %s4, 4
          %s306 = int_to_ptr.hbm [resolvable:$true] %s305
          %s307 = sshll.u32 [#allocation10], 4
          %s308 = int_to_ptr.vmem [resolvable:$true] %s307
          %310 = dma.hbm_to_vmem [thread:$0]  %s306, 64, %s308, [#allocation9]
        $region28: #{fcn_forward.1} parent=11 // pred_fallthru
          _
        // Predicated region
        $region29: #{fcn_forward.1} parent=11 // pred_check
          %p311 = pneg %p155
        $region30: #{fcn_forward.1} parent=11 // pred_check_branch
          %313 = sbr.rel (%p311) target = $region32
        $region31: #{fcn_forward.1} parent=11 // pred_region
          %315 = vsyncadd [#allocation12], 0
          %s316 = sshll.u32 %s5, 4
          %s317 = int_to_ptr.hbm [resolvable:$true] %s316
          %s318 = sshll.u32 [#allocation11], 4
          %s319 = int_to_ptr.vmem [resolvable:$true] %s318
          %324 = dma.hbm_to_vmem [thread:$0]  %s317, 4096, %s319, [#allocation12], 64, 64, 4
        $region32: #{fcn_forward.1} parent=11 // pred_fallthru
          _
        // Predicated region
        $region33: #{fcn_forward.1} parent=11 // pred_check
          %p325 = pneg %p176
        $region34: #{fcn_forward.1} parent=11 // pred_check_branch
          %327 = sbr.rel (%p325) target = $region36
        $region35: #{fcn_forward.1} parent=11 // pred_region
          _
        $region36: #{fcn_forward.1} parent=11 // pred_fallthru
          _
        // Predicated region
        $region37: #{fcn_forward.1} parent=11 // pred_check
          %p328 = pneg %p197
        $region38: #{fcn_forward.1} parent=11 // pred_check_branch
          %330 = sbr.rel (%p328) target = $region40
        $region39: #{fcn_forward.1} parent=11 // pred_region
          %332 = vsyncadd [#allocation12], 0
          %s333 = sshll.u32 %s7, 4
          %s334 = int_to_ptr.hbm [resolvable:$true] %s333
          %s335 = sshll.u32 [#allocation13], 4
          %s336 = int_to_ptr.vmem [resolvable:$true] %s335
          %341 = dma.hbm_to_vmem [thread:$0]  %s334, 1024, %s336, [#allocation12], 64, 64, 4
        $region40: #{fcn_forward.1} parent=11 // pred_fallthru
          _
        // Predicated region
        $region41: #{fcn_forward.1} parent=11 // pred_check
          %p342 = pneg %p218
        $region42: #{fcn_forward.1} parent=11 // pred_check_branch
          %344 = sbr.rel (%p342) target = $region44
        $region43: #{fcn_forward.1} parent=11 // pred_region
          _
        $region44: #{fcn_forward.1} parent=11 // pred_fallthru
          _
      $region12: #{fcn_forward.1} parent=5 // pred_fallthru
        _
      %p345 = scmp.lt.s32.totalorder %s24, 2
      // Predicated region
      $region45: #{fcn_forward.1} parent=5 // pred_check
        %p346 = pneg %p345
      $region46: #{fcn_forward.1} parent=5 // pred_check_branch
        %348 = sbr.rel (%p346) target = $region48
      $region47: #{fcn_forward.1} parent=5 // pred_region
        // Predicated region
        $region49: #{fcn_forward.1} parent=47 // pred_check
          %p349 = pneg %p44
        $region50: #{fcn_forward.1} parent=47 // pred_check_branch
          %351 = sbr.rel (%p349) target = $region52
        $region51: #{fcn_forward.1} parent=47 // pred_region
          %s352 = sand.u32 %s34, 1
          %s353 = scalar_lea.sflag [#allocation3], %s352
          %s354 = sand.u32 %s34, 1
          %s355 = smul.addr %s354, 8
          %s356 = scalar_lea.vmem [#allocation2], %s355
          %358 = vsyncadd %s353, 0
          %s359 = smul.addr %s24, 8
          %s360 = scalar_lea.hbm %s0, %s359
          %s362 = sshll.u32 %s360, 4
          %s363 = int_to_ptr.hbm [resolvable:$true] %s362
          %s364 = sshll.u32 %s356, 4
          %s365 = int_to_ptr.vmem [resolvable:$true] %s364
          %367 = dma.hbm_to_vmem [thread:$0]  %s363, 128, %s365, %s353
        $region52: #{fcn_forward.1} parent=47 // pred_fallthru
          _
      $region48: #{fcn_forward.1} parent=5 // pred_fallthru
        _
      %p368 = scmp.le.s32.totalorder 1, %s24
      %p369 = scmp.lt.s32.totalorder %s24, 3
      %p370 = pnand %p368, %p369
      %p371 = pneg %p370
      // Predicated region
      $region53: #{fcn_forward.1} parent=5 // pred_check
        _
      $region54: #{fcn_forward.1} parent=5 // pred_check_branch
        %373 = sbr.rel (%p370) target = $region56
      $region55: #{fcn_forward.1} parent=5 // pred_region
        %s374 = ssub.s32 %s24, 1
        %s375 = sand.u32 %s37, 1
        %s376 = scalar_lea.sflag [#allocation3], %s375
        %s377 = sand.u32 %s37, 1
        %s378 = smul.addr %s377, 8
        %s379 = scalar_lea.vmem [#allocation2], %s378
        // Predicated region
        $region57: #{fcn_forward.1} parent=55 // pred_check
          %p380 = pneg %p50
        $region58: #{fcn_forward.1} parent=55 // pred_check_branch
          %382 = sbr.rel (%p380) target = $region60
        $region59: #{fcn_forward.1} parent=55 // pred_region
          %384 = dma.done %s376, 128
        $region60: #{fcn_forward.1} parent=55 // pred_fallthru
          _
        // Predicated region
        $region61: #{fcn_forward.1} parent=55 // pred_check
          %p385 = pneg %p71
        $region62: #{fcn_forward.1} parent=55 // pred_check_branch
          %387 = sbr.rel (%p385) target = $region64
        $region63: #{fcn_forward.1} parent=55 // pred_region
          %389 = dma.done [#allocation6], 512
        $region64: #{fcn_forward.1} parent=55 // pred_fallthru
          _
        // Predicated region
        $region65: #{fcn_forward.1} parent=55 // pred_check
          %p390 = pneg %p92
        $region66: #{fcn_forward.1} parent=55 // pred_check_branch
          %392 = sbr.rel (%p390) target = $region68
        $region67: #{fcn_forward.1} parent=55 // pred_region
          %394 = dma.done [#allocation6], 32
        $region68: #{fcn_forward.1} parent=55 // pred_fallthru
          _
        // Predicated region
        $region69: #{fcn_forward.1} parent=55 // pred_check
          %p395 = pneg %p113
        $region70: #{fcn_forward.1} parent=55 // pred_check_branch
          %397 = sbr.rel (%p395) target = $region72
        $region71: #{fcn_forward.1} parent=55 // pred_region
          %399 = dma.done [#allocation9], 8192
        $region72: #{fcn_forward.1} parent=55 // pred_fallthru
          _
        // Predicated region
        $region73: #{fcn_forward.1} parent=55 // pred_check
          %p400 = pneg %p134
        $region74: #{fcn_forward.1} parent=55 // pred_check_branch
          %402 = sbr.rel (%p400) target = $region76
        $region75: #{fcn_forward.1} parent=55 // pred_region
          %404 = dma.done [#allocation9], 64
        $region76: #{fcn_forward.1} parent=55 // pred_fallthru
          _
        // Predicated region
        $region77: #{fcn_forward.1} parent=55 // pred_check
          %p405 = pneg %p155
        $region78: #{fcn_forward.1} parent=55 // pred_check_branch
          %407 = sbr.rel (%p405) target = $region80
        $region79: #{fcn_forward.1} parent=55 // pred_region
          %409 = dma.done [#allocation12], 4096
        $region80: #{fcn_forward.1} parent=55 // pred_fallthru
          _
        // Predicated region
        $region81: #{fcn_forward.1} parent=55 // pred_check
          %p410 = pneg %p197
        $region82: #{fcn_forward.1} parent=55 // pred_check_branch
          %412 = sbr.rel (%p410) target = $region84
        $region83: #{fcn_forward.1} parent=55 // pred_region
          %414 = dma.done [#allocation12], 1024
        $region84: #{fcn_forward.1} parent=55 // pred_fallthru
          _
        %s415 = sand.u32 %s37, 1
        %s416 = scalar_lea.sflag [#allocation3], %s415
        %s417 = sand.u32 %s37, 1
        %s418 = smul.addr %s417, 8
        %s419 = scalar_lea.vmem [#allocation2], %s418
        %p420 = pneg %p50
        %p421 = pneg %p47
        %p422 = pneg %p71
        %p423 = pneg %p68
        %p424 = pneg %p92
        %p425 = pneg %p89
        %p426 = pneg %p113
        %p427 = pneg %p110
        %p428 = pneg %p134
        %p429 = pneg %p131
        %p430 = pneg %p155
        %p431 = pneg %p152
        %p432 = pneg %p176
        %p433 = pneg %p173
        %p434 = pneg %p197
        %p435 = pneg %p194
        %p436 = pneg %p218
        %p437 = pneg %p215
        %p438 = pneg %p244
        %p439 = pneg %p241
        %s440 = sand.u32 %s231, 1
        %s441 = scalar_lea.sflag [#allocation4], %s440
        %s442 = sand.u32 %s231, 1
        %s443 = smul.addr %s442, 8
        %s444 = scalar_lea.vmem [#allocation14], %s443
        %v446 = vld [vmem:[%s379] sm:$0xff]
        %v447 = vpack.c.bf16 %v446, %v446
        %v448 = vld [vmem:[#allocation5] sm:$0xff]
        %v449 = vld [vmem:[#allocation5 + $0x8] sm:$0xff]
        %v450 = vld [vmem:[#allocation5 + $0x10] sm:$0xff]
        %v451 = vld [vmem:[#allocation5 + $0x18] sm:$0xff]
        %v452 = vld [vmem:[#allocation7] sm:$0x3]
        %v454 = vperm.slane %v452, 0
        %v455 = vperm.slane %v452, 1
        %v462 = vunpack.c.l.b16 %v448
        %v463 = vunpack.c.h.b16 %v448
        %v464 = vunpack.c.l.b16 %v449
        %v465 = vunpack.c.h.b16 %v449
        %v466 = vunpack.c.l.b16 %v450
        %v467 = vunpack.c.h.b16 %v450
        %v468 = vunpack.c.l.b16 %v451
        %v469 = vunpack.c.h.b16 %v451
        %v470 = vpack.c.b16 %v464, %v462
        %v471 = vpack.c.b16 %v465, %v463
        %v472 = vpack.c.b16 %v468, %v466
        %v473 = vpack.c.b16 %v469, %v467
        %vm478 = vcmask 261120
        %v480 = vsel %vm478, %v447, 0
        %482 = vmatpush.bf16.msra.mxu0 0
        %483 = vmatpush.bf16.msra.mxu0 0
        %484 = vmatpush.bf16.msra.mxu0 0
        %485 = vmatpush.bf16.msra.mxu0 0
        %486 = vmatpush.bf16.msra.mxu0 0
        %487 = vmatpush.bf16.msra.mxu0 0
        %488 = vmatpush.bf16.msra.mxu0 %v472
        %489 = vmatpush.bf16.msra.mxu0 %v470
        %490 = vmatmul.bf16.gmra.mxu0 %v480
        %v491 = vpop.f32.mrf.mxu0
        %v492 = vadd.f32 %v454, %v491
        %v493 = vpop.f32.mrf.mxu0
        %494 = vdwg.mxu0
        %495 = vmatpush.bf16.msra.mxu0 0
        %496 = vmatpush.bf16.msra.mxu0 0
        %497 = vmatpush.bf16.msra.mxu0 0
        %498 = vmatpush.bf16.msra.mxu0 0
        %499 = vmatpush.bf16.msra.mxu0 0
        %500 = vmatpush.bf16.msra.mxu0 0
        %501 = vmatpush.bf16.msra.mxu0 %v473
        %502 = vmatpush.bf16.msra.mxu0 %v471
        %503 = vmatmul.bf16.gmra.mxu0 %v480
        %v504 = vpop.f32.mrf.mxu0
        %v505 = vadd.f32 %v455, %v504
        %v506 = vpop.f32.mrf.mxu0
        %507 = vdwg.mxu0
        %v508 = vmax.f32 %v492, 0.0
        %v509 = vmax.f32 %v505, 0.0
        %v510 = vpack.c.bf16 %v508, %v508
        %v511 = vpack.c.bf16 %v509, %v509
        %v512 = vld [vmem:[#allocation8] sm:$0xff]
        %v513 = vld [vmem:[#allocation8 + $0x8] sm:$0xff]
        %v514 = vld [vmem:[#allocation8 + $0x10] sm:$0xff]
        %v515 = vld [vmem:[#allocation8 + $0x18] sm:$0xff]
        %v516 = vld [vmem:[#allocation8 + $0x20] sm:$0xff]
        %v517 = vld [vmem:[#allocation8 + $0x28] sm:$0xff]
        %v518 = vld [vmem:[#allocation8 + $0x30] sm:$0xff]
        %v519 = vld [vmem:[#allocation8 + $0x38] sm:$0xff]
        %v520 = vld [vmem:[#allocation8 + $0x40] sm:$0xff]
        %v521 = vld [vmem:[#allocation8 + $0x48] sm:$0xff]
        %v522 = vld [vmem:[#allocation8 + $0x50] sm:$0xff]
        %v523 = vld [vmem:[#allocation8 + $0x58] sm:$0xff]
        %v524 = vld [vmem:[#allocation8 + $0x60] sm:$0xff]
        %v525 = vld [vmem:[#allocation8 + $0x68] sm:$0xff]
        %v526 = vld [vmem:[#allocation8 + $0x70] sm:$0xff]
        %v527 = vld [vmem:[#allocation8 + $0x78] sm:$0xff]
        %v528 = vld [vmem:[#allocation8 + $0x80] sm:$0xff]
        %v529 = vld [vmem:[#allocation8 + $0x88] sm:$0xff]
        %v530 = vld [vmem:[#allocation8 + $0x90] sm:$0xff]
        %v531 = vld [vmem:[#allocation8 + $0x98] sm:$0xff]
        %v532 = vld [vmem:[#allocation8 + $0xa0] sm:$0xff]
        %v533 = vld [vmem:[#allocation8 + $0xa8] sm:$0xff]
        %v534 = vld [vmem:[#allocation8 + $0xb0] sm:$0xff]
        %v535 = vld [vmem:[#allocation8 + $0xb8] sm:$0xff]
        %v536 = vld [vmem:[#allocation8 + $0xc0] sm:$0xff]
        %v537 = vld [vmem:[#allocation8 + $0xc8] sm:$0xff]
        %v538 = vld [vmem:[#allocation8 + $0xd0] sm:$0xff]
        %v539 = vld [vmem:[#allocation8 + $0xd8] sm:$0xff]
        %v540 = vld [vmem:[#allocation8 + $0xe0] sm:$0xff]
        %v541 = vld [vmem:[#allocation8 + $0xe8] sm:$0xff]
        %v542 = vld [vmem:[#allocation8 + $0xf0] sm:$0xff]
        %v543 = vld [vmem:[#allocation8 + $0xf8] sm:$0xff]
        %v544 = vld [vmem:[#allocation8 + $0x100] sm:$0xff]
        %v545 = vld [vmem:[#allocation8 + $0x108] sm:$0xff]
        %v546 = vld [vmem:[#allocation8 + $0x110] sm:$0xff]
        %v547 = vld [vmem:[#allocation8 + $0x118] sm:$0xff]
        %v548 = vld [vmem:[#allocation8 + $0x120] sm:$0xff]
        %v549 = vld [vmem:[#allocation8 + $0x128] sm:$0xff]
        %v550 = vld [vmem:[#allocation8 + $0x130] sm:$0xff]
        %v551 = vld [vmem:[#allocation8 + $0x138] sm:$0xff]
        %v552 = vld [vmem:[#allocation8 + $0x140] sm:$0xff]
        %v553 = vld [vmem:[#allocation8 + $0x148] sm:$0xff]
        %v554 = vld [vmem:[#allocation8 + $0x150] sm:$0xff]
        %v555 = vld [vmem:[#allocation8 + $0x158] sm:$0xff]
        %v556 = vld [vmem:[#allocation8 + $0x160] sm:$0xff]
        %v557 = vld [vmem:[#allocation8 + $0x168] sm:$0xff]
        %v558 = vld [vmem:[#allocation8 + $0x170] sm:$0xff]
        %v559 = vld [vmem:[#allocation8 + $0x178] sm:$0xff]
        %v560 = vld [vmem:[#allocation8 + $0x180] sm:$0xff]
        %v561 = vld [vmem:[#allocation8 + $0x188] sm:$0xff]
        %v562 = vld [vmem:[#allocation8 + $0x190] sm:$0xff]
        %v563 = vld [vmem:[#allocation8 + $0x198] sm:$0xff]
        %v564 = vld [vmem:[#allocation8 + $0x1a0] sm:$0xff]
        %v565 = vld [vmem:[#allocation8 + $0x1a8] sm:$0xff]
        %v566 = vld [vmem:[#allocation8 + $0x1b0] sm:$0xff]
        %v567 = vld [vmem:[#allocation8 + $0x1b8] sm:$0xff]
        %v568 = vld [vmem:[#allocation8 + $0x1c0] sm:$0xff]
        %v569 = vld [vmem:[#allocation8 + $0x1c8] sm:$0xff]
        %v570 = vld [vmem:[#allocation8 + $0x1d0] sm:$0xff]
        %v571 = vld [vmem:[#allocation8 + $0x1d8] sm:$0xff]
        %v572 = vld [vmem:[#allocation8 + $0x1e0] sm:$0xff]
        %v573 = vld [vmem:[#allocation8 + $0x1e8] sm:$0xff]
        %v574 = vld [vmem:[#allocation8 + $0x1f0] sm:$0xff]
        %v575 = vld [vmem:[#allocation8 + $0x1f8] sm:$0xff]
        %v576 = vld [vmem:[#allocation10] sm:$0xf]
        %v578 = vperm.slane %v576, 0
        %v579 = vperm.slane %v576, 1
        %v580 = vperm.slane %v576, 2
        %v581 = vperm.slane %v576, 3
        %v650 = vunpack.c.l.b16 %v512
        %v651 = vunpack.c.h.b16 %v512
        %v652 = vunpack.c.l.b16 %v513
        %v653 = vunpack.c.h.b16 %v513
        %v654 = vunpack.c.l.b16 %v514
        %v655 = vunpack.c.h.b16 %v514
        %v656 = vunpack.c.l.b16 %v515
        %v657 = vunpack.c.h.b16 %v515
        %v658 = vunpack.c.l.b16 %v516
        %v659 = vunpack.c.h.b16 %v516
        %v660 = vunpack.c.l.b16 %v517
        %v661 = vunpack.c.h.b16 %v517
        %v662 = vunpack.c.l.b16 %v518
        %v663 = vunpack.c.h.b16 %v518
        %v664 = vunpack.c.l.b16 %v519
        %v665 = vunpack.c.h.b16 %v519
        %v666 = vunpack.c.l.b16 %v520
        %v667 = vunpack.c.h.b16 %v520
        %v668 = vunpack.c.l.b16 %v521
        %v669 = vunpack.c.h.b16 %v521
        %v670 = vunpack.c.l.b16 %v522
        %v671 = vunpack.c.h.b16 %v522
        %v672 = vunpack.c.l.b16 %v523
        %v673 = vunpack.c.h.b16 %v523
        %v674 = vunpack.c.l.b16 %v524
        %v675 = vunpack.c.h.b16 %v524
        %v676 = vunpack.c.l.b16 %v525
        %v677 = vunpack.c.h.b16 %v525
        %v678 = vunpack.c.l.b16 %v526
        %v679 = vunpack.c.h.b16 %v526
        %v680 = vunpack.c.l.b16 %v527
        %v681 = vunpack.c.h.b16 %v527
        %v682 = vunpack.c.l.b16 %v528
        %v683 = vunpack.c.h.b16 %v528
        %v684 = vunpack.c.l.b16 %v529
        %v685 = vunpack.c.h.b16 %v529
        %v686 = vunpack.c.l.b16 %v530
        %v687 = vunpack.c.h.b16 %v530
        %v688 = vunpack.c.l.b16 %v531
        %v689 = vunpack.c.h.b16 %v531
        %v690 = vunpack.c.l.b16 %v532
        %v691 = vunpack.c.h.b16 %v532
        %v692 = vunpack.c.l.b16 %v533
        %v693 = vunpack.c.h.b16 %v533
        %v694 = vunpack.c.l.b16 %v534
        %v695 = vunpack.c.h.b16 %v534
        %v696 = vunpack.c.l.b16 %v535
        %v697 = vunpack.c.h.b16 %v535
        %v698 = vunpack.c.l.b16 %v536
        %v699 = vunpack.c.h.b16 %v536
        %v700 = vunpack.c.l.b16 %v537
        %v701 = vunpack.c.h.b16 %v537
        %v702 = vunpack.c.l.b16 %v538
        %v703 = vunpack.c.h.b16 %v538
        %v704 = vunpack.c.l.b16 %v539
        %v705 = vunpack.c.h.b16 %v539
        %v706 = vunpack.c.l.b16 %v540
        %v707 = vunpack.c.h.b16 %v540
        %v708 = vunpack.c.l.b16 %v541
        %v709 = vunpack.c.h.b16 %v541
        %v710 = vunpack.c.l.b16 %v542
        %v711 = vunpack.c.h.b16 %v542
        %v712 = vunpack.c.l.b16 %v543
        %v713 = vunpack.c.h.b16 %v543
        %v714 = vunpack.c.l.b16 %v544
        %v715 = vunpack.c.h.b16 %v544
        %v716 = vunpack.c.l.b16 %v545
        %v717 = vunpack.c.h.b16 %v545
        %v718 = vunpack.c.l.b16 %v546
        %v719 = vunpack.c.h.b16 %v546
        %v720 = vunpack.c.l.b16 %v547
        %v721 = vunpack.c.h.b16 %v547
        %v722 = vunpack.c.l.b16 %v548
        %v723 = vunpack.c.h.b16 %v548
        %v724 = vunpack.c.l.b16 %v549
        %v725 = vunpack.c.h.b16 %v549
        %v726 = vunpack.c.l.b16 %v550
        %v727 = vunpack.c.h.b16 %v550
        %v728 = vunpack.c.l.b16 %v551
        %v729 = vunpack.c.h.b16 %v551
        %v730 = vunpack.c.l.b16 %v552
        %v731 = vunpack.c.h.b16 %v552
        %v732 = vunpack.c.l.b16 %v553
        %v733 = vunpack.c.h.b16 %v553
        %v734 = vunpack.c.l.b16 %v554
        %v735 = vunpack.c.h.b16 %v554
        %v736 = vunpack.c.l.b16 %v555
        %v737 = vunpack.c.h.b16 %v555
        %v738 = vunpack.c.l.b16 %v556
        %v739 = vunpack.c.h.b16 %v556
        %v740 = vunpack.c.l.b16 %v557
        %v741 = vunpack.c.h.b16 %v557
        %v742 = vunpack.c.l.b16 %v558
        %v743 = vunpack.c.h.b16 %v558
        %v744 = vunpack.c.l.b16 %v559
        %v745 = vunpack.c.h.b16 %v559
        %v746 = vunpack.c.l.b16 %v560
        %v747 = vunpack.c.h.b16 %v560
        %v748 = vunpack.c.l.b16 %v561
        %v749 = vunpack.c.h.b16 %v561
        %v750 = vunpack.c.l.b16 %v562
        %v751 = vunpack.c.h.b16 %v562
        %v752 = vunpack.c.l.b16 %v563
        %v753 = vunpack.c.h.b16 %v563
        %v754 = vunpack.c.l.b16 %v564
        %v755 = vunpack.c.h.b16 %v564
        %v756 = vunpack.c.l.b16 %v565
        %v757 = vunpack.c.h.b16 %v565
        %v758 = vunpack.c.l.b16 %v566
        %v759 = vunpack.c.h.b16 %v566
        %v760 = vunpack.c.l.b16 %v567
        %v761 = vunpack.c.h.b16 %v567
        %v762 = vunpack.c.l.b16 %v568
        %v763 = vunpack.c.h.b16 %v568
        %v764 = vunpack.c.l.b16 %v569
        %v765 = vunpack.c.h.b16 %v569
        %v766 = vunpack.c.l.b16 %v570
        %v767 = vunpack.c.h.b16 %v570
        %v768 = vunpack.c.l.b16 %v571
        %v769 = vunpack.c.h.b16 %v571
        %v770 = vunpack.c.l.b16 %v572
        %v771 = vunpack.c.h.b16 %v572
        %v772 = vunpack.c.l.b16 %v573
        %v773 = vunpack.c.h.b16 %v573
        %v774 = vunpack.c.l.b16 %v574
        %v775 = vunpack.c.h.b16 %v574
        %v776 = vunpack.c.l.b16 %v575
        %v777 = vunpack.c.h.b16 %v575
        %v778 = vpack.c.b16 %v654, %v650
        %v779 = vpack.c.b16 %v655, %v651
        %v780 = vpack.c.b16 %v656, %v652
        %v781 = vpack.c.b16 %v657, %v653
        %v782 = vpack.c.b16 %v662, %v658
        %v783 = vpack.c.b16 %v663, %v659
        %v784 = vpack.c.b16 %v664, %v660
        %v785 = vpack.c.b16 %v665, %v661
        %v786 = vpack.c.b16 %v670, %v666
        %v787 = vpack.c.b16 %v671, %v667
        %v788 = vpack.c.b16 %v672, %v668
        %v789 = vpack.c.b16 %v673, %v669
        %v790 = vpack.c.b16 %v678, %v674
        %v791 = vpack.c.b16 %v679, %v675
        %v792 = vpack.c.b16 %v680, %v676
        %v793 = vpack.c.b16 %v681, %v677
        %v794 = vpack.c.b16 %v686, %v682
        %v795 = vpack.c.b16 %v687, %v683
        %v796 = vpack.c.b16 %v688, %v684
        %v797 = vpack.c.b16 %v689, %v685
        %v798 = vpack.c.b16 %v694, %v690
        %v799 = vpack.c.b16 %v695, %v691
        %v800 = vpack.c.b16 %v696, %v692
        %v801 = vpack.c.b16 %v697, %v693
        %v802 = vpack.c.b16 %v702, %v698
        %v803 = vpack.c.b16 %v703, %v699
        %v804 = vpack.c.b16 %v704, %v700
        %v805 = vpack.c.b16 %v705, %v701
        %v806 = vpack.c.b16 %v710, %v706
        %v807 = vpack.c.b16 %v711, %v707
        %v808 = vpack.c.b16 %v712, %v708
        %v809 = vpack.c.b16 %v713, %v709
        %v810 = vpack.c.b16 %v718, %v714
        %v811 = vpack.c.b16 %v719, %v715
        %v812 = vpack.c.b16 %v720, %v716
        %v813 = vpack.c.b16 %v721, %v717
        %v814 = vpack.c.b16 %v726, %v722
        %v815 = vpack.c.b16 %v727, %v723
        %v816 = vpack.c.b16 %v728, %v724
        %v817 = vpack.c.b16 %v729, %v725
        %v818 = vpack.c.b16 %v734, %v730
        %v819 = vpack.c.b16 %v735, %v731
        %v820 = vpack.c.b16 %v736, %v732
        %v821 = vpack.c.b16 %v737, %v733
        %v822 = vpack.c.b16 %v742, %v738
        %v823 = vpack.c.b16 %v743, %v739
        %v824 = vpack.c.b16 %v744, %v740
        %v825 = vpack.c.b16 %v745, %v741
        %v826 = vpack.c.b16 %v750, %v746
        %v827 = vpack.c.b16 %v751, %v747
        %v828 = vpack.c.b16 %v752, %v748
        %v829 = vpack.c.b16 %v753, %v749
        %v830 = vpack.c.b16 %v758, %v754
        %v831 = vpack.c.b16 %v759, %v755
        %v832 = vpack.c.b16 %v760, %v756
        %v833 = vpack.c.b16 %v761, %v757
        %v834 = vpack.c.b16 %v766, %v762
        %v835 = vpack.c.b16 %v767, %v763
        %v836 = vpack.c.b16 %v768, %v764
        %v837 = vpack.c.b16 %v769, %v765
        %v838 = vpack.c.b16 %v774, %v770
        %v839 = vpack.c.b16 %v775, %v771
        %v840 = vpack.c.b16 %v776, %v772
        %v841 = vpack.c.b16 %v777, %v773
        %906 = vmatpush.bf16.msra.mxu0 %v806
        %907 = vmatpush.bf16.msra.mxu0 %v802
        %908 = vmatpush.bf16.msra.mxu0 %v798
        %909 = vmatpush.bf16.msra.mxu0 %v794
        %910 = vmatpush.bf16.msra.mxu0 %v790
        %911 = vmatpush.bf16.msra.mxu0 %v786
        %912 = vmatpush.bf16.msra.mxu0 %v782
        %913 = vmatpush.bf16.msra.mxu0 %v778
        %914 = vmatmul.bf16.gmra.mxu0 %v510
        %v915 = vpop.f32.mrf.mxu0
        %v916 = vadd.f32 %v578, %v915
        %v917 = vpop.f32.mrf.mxu0
        %918 = vdwg.mxu0
        %919 = vmatpush.bf16.msra.mxu0 %v838
        %920 = vmatpush.bf16.msra.mxu0 %v834
        %921 = vmatpush.bf16.msra.mxu0 %v830
        %922 = vmatpush.bf16.msra.mxu0 %v826
        %923 = vmatpush.bf16.msra.mxu0 %v822
        %924 = vmatpush.bf16.msra.mxu0 %v818
        %925 = vmatpush.bf16.msra.mxu0 %v814
        %926 = vmatpush.bf16.msra.mxu0 %v810
        %927 = vmatmul.bf16.gmra.mxu0 %v511
        %v928 = vpop.f32.mrf.mxu0
        %v929 = vadd.f32 %v916, %v928
        %v930 = vpop.f32.mrf.mxu0
        %931 = vdwg.mxu0
        %932 = vmatpush.bf16.msra.mxu0 %v807
        %933 = vmatpush.bf16.msra.mxu0 %v803
        %934 = vmatpush.bf16.msra.mxu0 %v799
        %935 = vmatpush.bf16.msra.mxu0 %v795
        %936 = vmatpush.bf16.msra.mxu0 %v791
        %937 = vmatpush.bf16.msra.mxu0 %v787
        %938 = vmatpush.bf16.msra.mxu0 %v783
        %939 = vmatpush.bf16.msra.mxu0 %v779
        %940 = vmatmul.bf16.gmra.mxu0 %v510
        %v941 = vpop.f32.mrf.mxu0
        %v942 = vadd.f32 %v579, %v941
        %v943 = vpop.f32.mrf.mxu0
        %944 = vdwg.mxu0
        %945 = vmatpush.bf16.msra.mxu0 %v839
        %946 = vmatpush.bf16.msra.mxu0 %v835
        %947 = vmatpush.bf16.msra.mxu0 %v831
        %948 = vmatpush.bf16.msra.mxu0 %v827
        %949 = vmatpush.bf16.msra.mxu0 %v823
        %950 = vmatpush.bf16.msra.mxu0 %v819
        %951 = vmatpush.bf16.msra.mxu0 %v815
        %952 = vmatpush.bf16.msra.mxu0 %v811
        %953 = vmatmul.bf16.gmra.mxu0 %v511
        %v954 = vpop.f32.mrf.mxu0
        %v955 = vadd.f32 %v942, %v954
        %v956 = vpop.f32.mrf.mxu0
        %957 = vdwg.mxu0
        %958 = vmatpush.bf16.msra.mxu0 %v808
        %959 = vmatpush.bf16.msra.mxu0 %v804
        %960 = vmatpush.bf16.msra.mxu0 %v800
        %961 = vmatpush.bf16.msra.mxu0 %v796
        %962 = vmatpush.bf16.msra.mxu0 %v792
        %963 = vmatpush.bf16.msra.mxu0 %v788
        %964 = vmatpush.bf16.msra.mxu0 %v784
        %965 = vmatpush.bf16.msra.mxu0 %v780
        %966 = vmatmul.bf16.gmra.mxu0 %v510
        %v967 = vpop.f32.mrf.mxu0
        %v968 = vadd.f32 %v580, %v967
        %v969 = vpop.f32.mrf.mxu0
        %970 = vdwg.mxu0
        %971 = vmatpush.bf16.msra.mxu0 %v840
        %972 = vmatpush.bf16.msra.mxu0 %v836
        %973 = vmatpush.bf16.msra.mxu0 %v832
        %974 = vmatpush.bf16.msra.mxu0 %v828
        %975 = vmatpush.bf16.msra.mxu0 %v824
        %976 = vmatpush.bf16.msra.mxu0 %v820
        %977 = vmatpush.bf16.msra.mxu0 %v816
        %978 = vmatpush.bf16.msra.mxu0 %v812
        %979 = vmatmul.bf16.gmra.mxu0 %v511
        %v980 = vpop.f32.mrf.mxu0
        %v981 = vadd.f32 %v968, %v980
        %v982 = vpop.f32.mrf.mxu0
        %983 = vdwg.mxu0
        %984 = vmatpush.bf16.msra.mxu0 %v809
        %985 = vmatpush.bf16.msra.mxu0 %v805
        %986 = vmatpush.bf16.msra.mxu0 %v801
        %987 = vmatpush.bf16.msra.mxu0 %v797
        %988 = vmatpush.bf16.msra.mxu0 %v793
        %989 = vmatpush.bf16.msra.mxu0 %v789
        %990 = vmatpush.bf16.msra.mxu0 %v785
        %991 = vmatpush.bf16.msra.mxu0 %v781
        %992 = vmatmul.bf16.gmra.mxu0 %v510
        %v993 = vpop.f32.mrf.mxu0
        %v994 = vadd.f32 %v581, %v993
        %v995 = vpop.f32.mrf.mxu0
        %996 = vdwg.mxu0
        %997 = vmatpush.bf16.msra.mxu0 %v841
        %998 = vmatpush.bf16.msra.mxu0 %v837
        %999 = vmatpush.bf16.msra.mxu0 %v833
        %1000 = vmatpush.bf16.msra.mxu0 %v829
        %1001 = vmatpush.bf16.msra.mxu0 %v825
        %1002 = vmatpush.bf16.msra.mxu0 %v821
        %1003 = vmatpush.bf16.msra.mxu0 %v817
        %1004 = vmatpush.bf16.msra.mxu0 %v813
        %1005 = vmatmul.bf16.gmra.mxu0 %v511
        %v1006 = vpop.f32.mrf.mxu0
        %v1007 = vadd.f32 %v994, %v1006
        %v1008 = vpop.f32.mrf.mxu0
        %1009 = vdwg.mxu0
        %v1010 = vmax.f32 %v929, 0.0
        %v1011 = vmax.f32 %v955, 0.0
        %v1012 = vmax.f32 %v981, 0.0
        %v1013 = vmax.f32 %v1007, 0.0
        %v1014 = vpack.c.bf16 %v1010, %v1010
        %v1015 = vpack.c.bf16 %v1011, %v1011
        %v1016 = vpack.c.bf16 %v1012, %v1012
        %v1017 = vpack.c.bf16 %v1013, %v1013
        %v1018 = vld [vmem:[#allocation11] sm:$0xf]
        %v1019 = vld [vmem:[#allocation11 + $0x4] sm:$0xf]
        %v1020 = vld [vmem:[#allocation11 + $0x8] sm:$0xf]
        %v1021 = vld [vmem:[#allocation11 + $0xc] sm:$0xf]
        %v1022 = vld [vmem:[#allocation11 + $0x10] sm:$0xf]
        %v1023 = vld [vmem:[#allocation11 + $0x14] sm:$0xf]
        %v1024 = vld [vmem:[#allocation11 + $0x18] sm:$0xf]
        %v1025 = vld [vmem:[#allocation11 + $0x1c] sm:$0xf]
        %v1026 = vld [vmem:[#allocation11 + $0x20] sm:$0xf]
        %v1027 = vld [vmem:[#allocation11 + $0x24] sm:$0xf]
        %v1028 = vld [vmem:[#allocation11 + $0x28] sm:$0xf]
        %v1029 = vld [vmem:[#allocation11 + $0x2c] sm:$0xf]
        %v1030 = vld [vmem:[#allocation11 + $0x30] sm:$0xf]
        %v1031 = vld [vmem:[#allocation11 + $0x34] sm:$0xf]
        %v1032 = vld [vmem:[#allocation11 + $0x38] sm:$0xf]
        %v1033 = vld [vmem:[#allocation11 + $0x3c] sm:$0xf]
        %v1034 = vld [vmem:[#allocation11 + $0x40] sm:$0xf]
        %v1035 = vld [vmem:[#allocation11 + $0x44] sm:$0xf]
        %v1036 = vld [vmem:[#allocation11 + $0x48] sm:$0xf]
        %v1037 = vld [vmem:[#allocation11 + $0x4c] sm:$0xf]
        %v1038 = vld [vmem:[#allocation11 + $0x50] sm:$0xf]
        %v1039 = vld [vmem:[#allocation11 + $0x54] sm:$0xf]
        %v1040 = vld [vmem:[#allocation11 + $0x58] sm:$0xf]
        %v1041 = vld [vmem:[#allocation11 + $0x5c] sm:$0xf]
        %v1042 = vld [vmem:[#allocation11 + $0x60] sm:$0xf]
        %v1043 = vld [vmem:[#allocation11 + $0x64] sm:$0xf]
        %v1044 = vld [vmem:[#allocation11 + $0x68] sm:$0xf]
        %v1045 = vld [vmem:[#allocation11 + $0x6c] sm:$0xf]
        %v1046 = vld [vmem:[#allocation11 + $0x70] sm:$0xf]
        %v1047 = vld [vmem:[#allocation11 + $0x74] sm:$0xf]
        %v1048 = vld [vmem:[#allocation11 + $0x78] sm:$0xf]
        %v1049 = vld [vmem:[#allocation11 + $0x7c] sm:$0xf]
        %v1050 = vld [vmem:[#allocation11 + $0x80] sm:$0xf]
        %v1051 = vld [vmem:[#allocation11 + $0x84] sm:$0xf]
        %v1052 = vld [vmem:[#allocation11 + $0x88] sm:$0xf]
        %v1053 = vld [vmem:[#allocation11 + $0x8c] sm:$0xf]
        %v1054 = vld [vmem:[#allocation11 + $0x90] sm:$0xf]
        %v1055 = vld [vmem:[#allocation11 + $0x94] sm:$0xf]
        %v1056 = vld [vmem:[#allocation11 + $0x98] sm:$0xf]
        %v1057 = vld [vmem:[#allocation11 + $0x9c] sm:$0xf]
        %v1058 = vld [vmem:[#allocation11 + $0xa0] sm:$0xf]
        %v1059 = vld [vmem:[#allocation11 + $0xa4] sm:$0xf]
        %v1060 = vld [vmem:[#allocation11 + $0xa8] sm:$0xf]
        %v1061 = vld [vmem:[#allocation11 + $0xac] sm:$0xf]
        %v1062 = vld [vmem:[#allocation11 + $0xb0] sm:$0xf]
        %v1063 = vld [vmem:[#allocation11 + $0xb4] sm:$0xf]
        %v1064 = vld [vmem:[#allocation11 + $0xb8] sm:$0xf]
        %v1065 = vld [vmem:[#allocation11 + $0xbc] sm:$0xf]
        %v1066 = vld [vmem:[#allocation11 + $0xc0] sm:$0xf]
        %v1067 = vld [vmem:[#allocation11 + $0xc4] sm:$0xf]
        %v1068 = vld [vmem:[#allocation11 + $0xc8] sm:$0xf]
        %v1069 = vld [vmem:[#allocation11 + $0xcc] sm:$0xf]
        %v1070 = vld [vmem:[#allocation11 + $0xd0] sm:$0xf]
        %v1071 = vld [vmem:[#allocation11 + $0xd4] sm:$0xf]
        %v1072 = vld [vmem:[#allocation11 + $0xd8] sm:$0xf]
        %v1073 = vld [vmem:[#allocation11 + $0xdc] sm:$0xf]
        %v1074 = vld [vmem:[#allocation11 + $0xe0] sm:$0xf]
        %v1075 = vld [vmem:[#allocation11 + $0xe4] sm:$0xf]
        %v1076 = vld [vmem:[#allocation11 + $0xe8] sm:$0xf]
        %v1077 = vld [vmem:[#allocation11 + $0xec] sm:$0xf]
        %v1078 = vld [vmem:[#allocation11 + $0xf0] sm:$0xf]
        %v1079 = vld [vmem:[#allocation11 + $0xf4] sm:$0xf]
        %v1080 = vld [vmem:[#allocation11 + $0xf8] sm:$0xf]
        %v1081 = vld [vmem:[#allocation11 + $0xfc] sm:$0xf]
        %v1082 = vld [vmem:[%s6] sm:$0x1]
        %v1084 = vperm.slane %v1082, 0
        %v1150 = vunpack.c.l.b16 %v1018
        %v1151 = vunpack.c.l.b16 %v1019
        %v1152 = vunpack.c.l.b16 %v1020
        %v1153 = vunpack.c.l.b16 %v1021
        %v1154 = vunpack.c.l.b16 %v1022
        %v1155 = vunpack.c.l.b16 %v1023
        %v1156 = vunpack.c.l.b16 %v1024
        %v1157 = vunpack.c.l.b16 %v1025
        %v1158 = vunpack.c.l.b16 %v1026
        %v1159 = vunpack.c.l.b16 %v1027
        %v1160 = vunpack.c.l.b16 %v1028
        %v1161 = vunpack.c.l.b16 %v1029
        %v1162 = vunpack.c.l.b16 %v1030
        %v1163 = vunpack.c.l.b16 %v1031
        %v1164 = vunpack.c.l.b16 %v1032
        %v1165 = vunpack.c.l.b16 %v1033
        %v1166 = vunpack.c.l.b16 %v1034
        %v1167 = vunpack.c.l.b16 %v1035
        %v1168 = vunpack.c.l.b16 %v1036
        %v1169 = vunpack.c.l.b16 %v1037
        %v1170 = vunpack.c.l.b16 %v1038
        %v1171 = vunpack.c.l.b16 %v1039
        %v1172 = vunpack.c.l.b16 %v1040
        %v1173 = vunpack.c.l.b16 %v1041
        %v1174 = vunpack.c.l.b16 %v1042
        %v1175 = vunpack.c.l.b16 %v1043
        %v1176 = vunpack.c.l.b16 %v1044
        %v1177 = vunpack.c.l.b16 %v1045
        %v1178 = vunpack.c.l.b16 %v1046
        %v1179 = vunpack.c.l.b16 %v1047
        %v1180 = vunpack.c.l.b16 %v1048
        %v1181 = vunpack.c.l.b16 %v1049
        %v1182 = vunpack.c.l.b16 %v1050
        %v1183 = vunpack.c.l.b16 %v1051
        %v1184 = vunpack.c.l.b16 %v1052
        %v1185 = vunpack.c.l.b16 %v1053
        %v1186 = vunpack.c.l.b16 %v1054
        %v1187 = vunpack.c.l.b16 %v1055
        %v1188 = vunpack.c.l.b16 %v1056
        %v1189 = vunpack.c.l.b16 %v1057
        %v1190 = vunpack.c.l.b16 %v1058
        %v1191 = vunpack.c.l.b16 %v1059
        %v1192 = vunpack.c.l.b16 %v1060
        %v1193 = vunpack.c.l.b16 %v1061
        %v1194 = vunpack.c.l.b16 %v1062
        %v1195 = vunpack.c.l.b16 %v1063
        %v1196 = vunpack.c.l.b16 %v1064
        %v1197 = vunpack.c.l.b16 %v1065
        %v1198 = vunpack.c.l.b16 %v1066
        %v1199 = vunpack.c.l.b16 %v1067
        %v1200 = vunpack.c.l.b16 %v1068
        %v1201 = vunpack.c.l.b16 %v1069
        %v1202 = vunpack.c.l.b16 %v1070
        %v1203 = vunpack.c.l.b16 %v1071
        %v1204 = vunpack.c.l.b16 %v1072
        %v1205 = vunpack.c.l.b16 %v1073
        %v1206 = vunpack.c.l.b16 %v1074
        %v1207 = vunpack.c.l.b16 %v1075
        %v1208 = vunpack.c.l.b16 %v1076
        %v1209 = vunpack.c.l.b16 %v1077
        %v1210 = vunpack.c.l.b16 %v1078
        %v1211 = vunpack.c.l.b16 %v1079
        %v1212 = vunpack.c.l.b16 %v1080
        %v1213 = vunpack.c.l.b16 %v1081
        %v1214 = vpack.c.b16 %v1151, %v1150
        %v1215 = vpack.c.b16 %v1153, %v1152
        %v1216 = vpack.c.b16 %v1155, %v1154
        %v1217 = vpack.c.b16 %v1157, %v1156
        %v1218 = vpack.c.b16 %v1159, %v1158
        %v1219 = vpack.c.b16 %v1161, %v1160
        %v1220 = vpack.c.b16 %v1163, %v1162
        %v1221 = vpack.c.b16 %v1165, %v1164
        %v1222 = vpack.c.b16 %v1167, %v1166
        %v1223 = vpack.c.b16 %v1169, %v1168
        %v1224 = vpack.c.b16 %v1171, %v1170
        %v1225 = vpack.c.b16 %v1173, %v1172
        %v1226 = vpack.c.b16 %v1175, %v1174
        %v1227 = vpack.c.b16 %v1177, %v1176
        %v1228 = vpack.c.b16 %v1179, %v1178
        %v1229 = vpack.c.b16 %v1181, %v1180
        %v1230 = vpack.c.b16 %v1183, %v1182
        %v1231 = vpack.c.b16 %v1185, %v1184
        %v1232 = vpack.c.b16 %v1187, %v1186
        %v1233 = vpack.c.b16 %v1189, %v1188
        %v1234 = vpack.c.b16 %v1191, %v1190
        %v1235 = vpack.c.b16 %v1193, %v1192
        %v1236 = vpack.c.b16 %v1195, %v1194
        %v1237 = vpack.c.b16 %v1197, %v1196
        %v1238 = vpack.c.b16 %v1199, %v1198
        %v1239 = vpack.c.b16 %v1201, %v1200
        %v1240 = vpack.c.b16 %v1203, %v1202
        %v1241 = vpack.c.b16 %v1205, %v1204
        %v1242 = vpack.c.b16 %v1207, %v1206
        %v1243 = vpack.c.b16 %v1209, %v1208
        %v1244 = vpack.c.b16 %v1211, %v1210
        %v1245 = vpack.c.b16 %v1213, %v1212
        %1278 = vmatpush.bf16.msra.mxu0 %v1221
        %1279 = vmatpush.bf16.msra.mxu0 %v1220
        %1280 = vmatpush.bf16.msra.mxu0 %v1219
        %1281 = vmatpush.bf16.msra.mxu0 %v1218
        %1282 = vmatpush.bf16.msra.mxu0 %v1217
        %1283 = vmatpush.bf16.msra.mxu0 %v1216
        %1284 = vmatpush.bf16.msra.mxu0 %v1215
        %1285 = vmatpush.bf16.msra.mxu0 %v1214
        %1286 = vmatmul.bf16.gmra.mxu0 %v1014
        %v1287 = vpop.f32.mrf.mxu0
        %v1288 = vadd.f32 %v1084, %v1287
        %v1289 = vpop.f32.mrf.mxu0
        %1290 = vdwg.mxu0
        %1291 = vmatpush.bf16.msra.mxu0 %v1229
        %1292 = vmatpush.bf16.msra.mxu0 %v1228
        %1293 = vmatpush.bf16.msra.mxu0 %v1227
        %1294 = vmatpush.bf16.msra.mxu0 %v1226
        %1295 = vmatpush.bf16.msra.mxu0 %v1225
        %1296 = vmatpush.bf16.msra.mxu0 %v1224
        %1297 = vmatpush.bf16.msra.mxu0 %v1223
        %1298 = vmatpush.bf16.msra.mxu0 %v1222
        %1299 = vmatmul.bf16.gmra.mxu0 %v1015
        %v1300 = vpop.f32.mrf.mxu0
        %v1301 = vadd.f32 %v1288, %v1300
        %v1302 = vpop.f32.mrf.mxu0
        %1303 = vdwg.mxu0
        %1304 = vmatpush.bf16.msra.mxu0 %v1237
        %1305 = vmatpush.bf16.msra.mxu0 %v1236
        %1306 = vmatpush.bf16.msra.mxu0 %v1235
        %1307 = vmatpush.bf16.msra.mxu0 %v1234
        %1308 = vmatpush.bf16.msra.mxu0 %v1233
        %1309 = vmatpush.bf16.msra.mxu0 %v1232
        %1310 = vmatpush.bf16.msra.mxu0 %v1231
        %1311 = vmatpush.bf16.msra.mxu0 %v1230
        %1312 = vmatmul.bf16.gmra.mxu0 %v1016
        %v1313 = vpop.f32.mrf.mxu0
        %v1314 = vadd.f32 %v1301, %v1313
        %v1315 = vpop.f32.mrf.mxu0
        %1316 = vdwg.mxu0
        %1317 = vmatpush.bf16.msra.mxu0 %v1245
        %1318 = vmatpush.bf16.msra.mxu0 %v1244
        %1319 = vmatpush.bf16.msra.mxu0 %v1243
        %1320 = vmatpush.bf16.msra.mxu0 %v1242
        %1321 = vmatpush.bf16.msra.mxu0 %v1241
        %1322 = vmatpush.bf16.msra.mxu0 %v1240
        %1323 = vmatpush.bf16.msra.mxu0 %v1239
        %1324 = vmatpush.bf16.msra.mxu0 %v1238
        %1325 = vmatmul.bf16.gmra.mxu0 %v1017
        %v1326 = vpop.f32.mrf.mxu0
        %v1327 = vadd.f32 %v1314, %v1326
        %v1328 = vpop.f32.mrf.mxu0
        %1329 = vdwg.mxu0
        %v1330 = vmax.f32 %v1327, 0.0
        %v1331 = vpack.c.bf16 %v1330, %v1330
        %v1332 = vld [vmem:[#allocation13] sm:$0xf]
        %v1333 = vld [vmem:[#allocation13 + $0x4] sm:$0xf]
        %v1334 = vld [vmem:[#allocation13 + $0x8] sm:$0xf]
        %v1335 = vld [vmem:[#allocation13 + $0xc] sm:$0xf]
        %v1336 = vld [vmem:[#allocation13 + $0x10] sm:$0xf]
        %v1337 = vld [vmem:[#allocation13 + $0x14] sm:$0xf]
        %v1338 = vld [vmem:[#allocation13 + $0x18] sm:$0xf]
        %v1339 = vld [vmem:[#allocation13 + $0x1c] sm:$0xf]
        %v1340 = vld [vmem:[#allocation13 + $0x20] sm:$0xf]
        %v1341 = vld [vmem:[#allocation13 + $0x24] sm:$0xf]
        %v1342 = vld [vmem:[#allocation13 + $0x28] sm:$0xf]
        %v1343 = vld [vmem:[#allocation13 + $0x2c] sm:$0xf]
        %v1344 = vld [vmem:[#allocation13 + $0x30] sm:$0xf]
        %v1345 = vld [vmem:[#allocation13 + $0x34] sm:$0xf]
        %v1346 = vld [vmem:[#allocation13 + $0x38] sm:$0xf]
        %v1347 = vld [vmem:[#allocation13 + $0x3c] sm:$0xf]
        %v1348 = vld [vmem:[%s8] sm:$0x1]
        %v1350 = vperm.slane %v1348, 0
        %v1368 = vunpack.c.l.b16 %v1332
        %v1369 = vunpack.c.l.b16 %v1333
        %v1370 = vunpack.c.l.b16 %v1334
        %v1371 = vunpack.c.l.b16 %v1335
        %v1372 = vunpack.c.l.b16 %v1336
        %v1373 = vunpack.c.l.b16 %v1337
        %v1374 = vunpack.c.l.b16 %v1338
        %v1375 = vunpack.c.l.b16 %v1339
        %v1376 = vunpack.c.l.b16 %v1340
        %v1377 = vunpack.c.l.b16 %v1341
        %v1378 = vunpack.c.l.b16 %v1342
        %v1379 = vunpack.c.l.b16 %v1343
        %v1380 = vunpack.c.l.b16 %v1344
        %v1381 = vunpack.c.l.b16 %v1345
        %v1382 = vunpack.c.l.b16 %v1346
        %v1383 = vunpack.c.l.b16 %v1347
        %v1384 = vpack.c.b16 %v1369, %v1368
        %v1385 = vpack.c.b16 %v1371, %v1370
        %v1386 = vpack.c.b16 %v1373, %v1372
        %v1387 = vpack.c.b16 %v1375, %v1374
        %v1388 = vpack.c.b16 %v1377, %v1376
        %v1389 = vpack.c.b16 %v1379, %v1378
        %v1390 = vpack.c.b16 %v1381, %v1380
        %v1391 = vpack.c.b16 %v1383, %v1382
        %1400 = vmatpush.bf16.msra.mxu0 %v1391
        %1401 = vmatpush.bf16.msra.mxu0 %v1390
        %1402 = vmatpush.bf16.msra.mxu0 %v1389
        %1403 = vmatpush.bf16.msra.mxu0 %v1388
        %1404 = vmatpush.bf16.msra.mxu0 %v1387
        %1405 = vmatpush.bf16.msra.mxu0 %v1386
        %1406 = vmatpush.bf16.msra.mxu0 %v1385
        %1407 = vmatpush.bf16.msra.mxu0 %v1384
        %1408 = vmatmul.bf16.gmra.mxu0 %v1331
        %v1409 = vpop.f32.mrf.mxu0
        %v1410 = vadd.f32 %v1350, %v1409
        %v1411 = vpop.f32.mrf.mxu0
        %1412 = vdwg.mxu0
        %1413 = vst [vmem:[%s444] sm:$0xff] %v1410
        %s1414 = sand.u32 %s231, 1
        %s1415 = scalar_lea.sflag [#allocation4], %s1414
        %s1416 = sand.u32 %s231, 1
        %s1417 = smul.addr %s1416, 8
        %s1418 = scalar_lea.vmem [#allocation14], %s1417
        // Predicated region
        $region85: #{fcn_forward.1} parent=55 // pred_check
          %p1419 = pneg %p241
        $region86: #{fcn_forward.1} parent=55 // pred_check_branch
          %1421 = sbr.rel (%p1419) target = $region88
        $region87: #{fcn_forward.1} parent=55 // pred_region
          %1423 = vsyncadd %s1415, 0
          %s1424 = smul.addr %s29, 8
          %s1425 = scalar_lea.hbm %s9, %s1424
          %s1427 = sshll.u32 %s1418, 4
          %s1428 = int_to_ptr.vmem [resolvable:$true] %s1427
          %s1429 = sshll.u32 %s1425, 4
          %s1430 = int_to_ptr.hbm [resolvable:$true] %s1429
          %1432 = dma.vmem_to_hbm [thread:$0]  %s1428, 128, %s1430, %s1415
        $region88: #{fcn_forward.1} parent=55 // pred_fallthru
          _
      $region56: #{fcn_forward.1} parent=5 // pred_fallthru
        _
      %p1433 = scmp.le.s32.totalorder 2, %s24
      // Predicated region
      $region89: #{fcn_forward.1} parent=5 // pred_check
        %p1434 = pneg %p1433
      $region90: #{fcn_forward.1} parent=5 // pred_check_branch
        %1436 = sbr.rel (%p1434) target = $region92
      $region91: #{fcn_forward.1} parent=5 // pred_region
        %s1437 = ssub.s32 %s24, 2
        // Predicated region
        $region93: #{fcn_forward.1} parent=91 // pred_check
          %p1438 = pneg %p247
        $region94: #{fcn_forward.1} parent=91 // pred_check_branch
          %1440 = sbr.rel (%p1438) target = $region96
        $region95: #{fcn_forward.1} parent=91 // pred_region
          %s1441 = sand.u32 %s232, 1
          %s1442 = scalar_lea.sflag [#allocation4], %s1441
          %s1443 = sand.u32 %s232, 1
          %s1444 = smul.addr %s1443, 8
          %s1445 = scalar_lea.vmem [#allocation14], %s1444
          %1447 = dma.done %s1442, 128
        $region96: #{fcn_forward.1} parent=91 // pred_fallthru
          _
      $region92: #{fcn_forward.1} parent=5 // pred_fallthru
        _
    $region6: #{fcn_forward.1} parent=1 // loop_footer
      %s28 = sadd.s32 1, %s24
    $region7: #{fcn_forward.1} parent=1 // loop_footer_branch
      %23 = sbr.rel target = $region3
    $region8: #{fcn_forward.1} parent=1 // loop_exit
      _
    %1448 = vsyncpa [#allocation3], 1
    %s1449 = scalar_lea.sflag [#allocation3], 1
    %1450 = vsyncpa %s1449, 1
    %1451 = vsyncpa [#allocation6], 1
    %1452 = vsyncpa [#allocation9], 1
    %1453 = vsyncpa [#allocation12], 1
    %1454 = vsyncpa [#allocation4], 1
    %s1455 = scalar_lea.sflag [#allocation4], 1
    %1456 = vsyncpa %s1455, 1

</llo_original>
